<compile_context>
chip_gen: v7x
topology: tpu7x:2x2x1
jax: 0.10.0
libtpu: 0.0.40
codegen_flags: <defaults>
</compile_context>

<pallas_src>
import jax
import jax.numpy as jnp
from jax import lax
from jax.experimental import pallas as pl
from jax.experimental.pallas import tpu as pltpu

LN_EPS = 1e-5  # PyTorch nn.LayerNorm default


def _round_up(x, m):
    return ((x + m - 1) // m) * m


def _mlm_kernel(x_ref, w1_ref, b1_ref, g_ref, beta_ref, w2_ref, b2_ref,
                o_ref, hn_ref):
    # Grid = (row_tiles, vocab_tiles); vocab axis is innermost + "arbitrary",
    # so the hn scratch written at j == 0 is valid for all vocab tiles of the
    # same row tile.
    @pl.when(pl.program_id(1) == 0)
    def _():
        x = x_ref[...].astype(w1_ref.dtype)
        # Linear 1 (MXU, f32 accumulate) + bias + ReLU
        h = jnp.dot(x, w1_ref[...], preferred_element_type=jnp.float32)
        h = h + b1_ref[...].astype(jnp.float32)        # (tm, H) + (1, H)
        h = jnp.maximum(h, 0.0)
        # LayerNorm over the hidden (last) axis, f32 math
        mean = jnp.mean(h, axis=-1, keepdims=True)
        centered = h - mean
        var = jnp.mean(centered * centered, axis=-1, keepdims=True)
        hn = centered * lax.rsqrt(var + LN_EPS)
        hn = hn * g_ref[...].astype(jnp.float32) + beta_ref[...].astype(jnp.float32)
        hn_ref[...] = hn

    # Linear 2 -> vocab-tile logits (cast activations to weight dtype so bf16
    # weights run a full-rate bf16 MXU matmul; accumulate in f32).
    hn = hn_ref[...].astype(w2_ref.dtype)
    out = jnp.dot(hn, w2_ref[...], preferred_element_type=jnp.float32)
    out = out + b2_ref[...].astype(jnp.float32)
    o_ref[...] = out.astype(o_ref.dtype)


def mask_lm_forward(X, pred_positions, params, *, tm=256, tn=512,
                    vmem_limit_bytes=48 * 1024 * 1024):
    """Pallas implementation of MaskLM.forward.

    X:              (B, S, num_inputs)
    pred_positions: (B, P) int32
    returns:        (B, P, vocab_size)
    """
    w1, b1, gamma, beta, w2, b2 = params
    B, S, num_inputs = X.shape
    P = pred_positions.shape[1]
    num_hiddens = w1.shape[1]
    vocab_size = w2.shape[1]

    # --- glue: gather masked positions (matches torch repeat_interleave gather)
    # TODO(synk): fold this gather into the kernel (scalar-prefetched row
    # indices + per-row DMA) to avoid an extra HBM round trip of activations.
    batch_idx = jnp.repeat(jnp.arange(B), P)          # (B*P,)
    flat_pos = pred_positions.reshape(-1)             # (B*P,)
    masked_X = X[batch_idx, flat_pos]                 # (B*P, num_inputs)

    M = B * P
    out_dtype = X.dtype

    # Tile sizes: keep the sublane dim aligned (8 for f32, 16 for bf16), keep
    # the vocab tile a lane-dense multiple of 128.  Shrink for tiny problems.
    row_align = 16 if out_dtype == jnp.bfloat16 else 8
    tm = int(min(tm, _round_up(M, row_align)))
    tn = int(min(tn, _round_up(vocab_size, 128)))

    M_pad = _round_up(M, tm)
    V_pad = _round_up(vocab_size, tn)

    if M_pad != M:
        masked_X = jnp.pad(masked_X, ((0, M_pad - M), (0, 0)))
    if V_pad != vocab_size:
        w2 = jnp.pad(w2, ((0, 0), (0, V_pad - vocab_size)))
        b2 = jnp.pad(b2, ((0, V_pad - vocab_size),))

    # 2-D biases / LN params so everything in-kernel stays >= 2D.
    b1_2d = b1.reshape(1, num_hiddens)
    g_2d = gamma.reshape(1, num_hiddens)
    beta_2d = beta.reshape(1, num_hiddens)
    b2_2d = b2.reshape(1, V_pad)

    grid = (M_pad // tm, V_pad // tn)

    out = pl.pallas_call(
        _mlm_kernel,
        out_shape=jax.ShapeDtypeStruct((M_pad, V_pad), out_dtype),
        grid_spec=pltpu.PrefetchScalarGridSpec(
            num_scalar_prefetch=0,
            grid=grid,
            in_specs=[
                # tile of gathered rows (re-used across the vocab axis)
                pl.BlockSpec((tm, num_inputs), lambda i, j: (i, 0)),
                # Linear-1 weights / bias / LN params: full, grid-invariant
                pl.BlockSpec((num_inputs, num_hiddens), lambda i, j: (0, 0)),
                pl.BlockSpec((1, num_hiddens), lambda i, j: (0, 0)),
                pl.BlockSpec((1, num_hiddens), lambda i, j: (0, 0)),
                pl.BlockSpec((1, num_hiddens), lambda i, j: (0, 0)),
                # Linear-2 weight / bias: streamed per vocab tile
                pl.BlockSpec((num_hiddens, tn), lambda i, j: (0, j)),
                pl.BlockSpec((1, tn), lambda i, j: (0, j)),
            ],
            out_specs=pl.BlockSpec((tm, tn), lambda i, j: (i, j)),
            # LayerNorm output cached across the vocab axis.
            scratch_shapes=[pltpu.VMEM((tm, num_hiddens), jnp.float32)],
        ),
        compiler_params=pltpu.CompilerParams(
            # row axis parallel (megacore), vocab axis carries the hn scratch
            dimension_semantics=("parallel", "arbitrary"),
            vmem_limit_bytes=vmem_limit_bytes,
        ),
    )(masked_X, w1, b1_2d, g_2d, beta_2d, w2, b2_2d)

    out = out[:M, :vocab_size]
    return out.reshape(B, P, vocab_size)


def init_params(key, num_inputs, num_hiddens, vocab_size, dtype=jnp.float32):
    """Deterministic synthetic parameters (shapes match nn.Linear/LayerNorm)."""
    k1, k2, k3, k4 = jax.random.split(key, 4)
    lim1 = 1.0 / (num_inputs ** 0.5)
    lim2 = 1.0 / (num_hiddens ** 0.5)
    w1 = jax.random.uniform(k1, (num_inputs, num_hiddens), dtype, -lim1, lim1)
    b1 = jax.random.uniform(k2, (num_hiddens,), dtype, -lim1, lim1)
    gamma = jnp.ones((num_hiddens,), dtype)
    beta = jnp.zeros((num_hiddens,), dtype)
    w2 = jax.random.uniform(k3, (num_hiddens, vocab_size), dtype, -lim2, lim2)
    b2 = jax.random.uniform(k4, (vocab_size,), dtype, -lim2, lim2)
    return (w1, b1, gamma, beta, w2, b2)


def _reference(X, pred_positions, params):
    """Pure-JAX reference of the PyTorch forward."""
    w1, b1, gamma, beta, w2, b2 = params
    B, _, _ = X.shape
    P = pred_positions.shape[1]
    batch_idx = jnp.repeat(jnp.arange(B), P)
    masked_X = X[batch_idx, pred_positions.reshape(-1)]
    h = jnp.maximum(masked_X @ w1 + b1, 0.0)
    mean = h.mean(-1, keepdims=True)
    var = ((h - mean) ** 2).mean(-1, keepdims=True)
    hn = (h - mean) / jnp.sqrt(var + LN_EPS) * gamma + beta
    out = hn @ w2 + b2
    return out.reshape(B, P, -1)


if __name__ == "__main__":
    key = jax.random.PRNGKey(0)

    # --- test 1: small, aligned shapes -------------------------------------
    B, S = 2, 16
    num_inputs, num_hiddens, vocab_size = 32, 64, 128
    P = 4

    kx, kp, kparam = jax.random.split(key, 3)
    X = jax.random.normal(kx, (B, S, num_inputs), jnp.float32)
    pred_positions = jax.random.randint(kp, (B, P), 0, S, jnp.int32)
    params = init_params(kparam, num_inputs, num_hiddens, vocab_size)

    y = jax.block_until_ready(mask_lm_forward(X, pred_positions, params))
    y_ref = _reference(X, pred_positions, params)
    assert y.shape == (B, P, vocab_size)
    assert jnp.allclose(y, y_ref, atol=1e-4, rtol=1e-4), "mismatch (test 1)"

    # --- test 2: non-aligned rows / vocab exercise the padding path --------
    B2, S2, P2 = 3, 16, 3
    vocab2 = 200  # not a multiple of 128
    kx2, kp2, kparam2 = jax.random.split(jax.random.PRNGKey(1), 3)
    X2 = jax.random.normal(kx2, (B2, S2, num_inputs), jnp.float32)
    pred_positions2 = jax.random.randint(kp2, (B2, P2), 0, S2, jnp.int32)
    params2 = init_params(kparam2, num_inputs, num_hiddens, vocab2)

    y2 = jax.block_until_ready(mask_lm_forward(X2, pred_positions2, params2))
    y2_ref = _reference(X2, pred_positions2, params2)
    assert y2.shape == (B2, P2, vocab2)
    assert jnp.allclose(y2, y2_ref, atol=1e-4, rtol=1e-4), "mismatch (test 2)"

    print("KERNEL_OK")
</pallas_src>

<mosaic_0001>
module attributes {stable_mosaic.version = 11 : i64} {
  func.func @_mlm_kernel(%arg0: i32, %arg1: i32, %arg2: memref<8x32xf32, #tpu.memory_space<vmem>>, %arg3: memref<32x64xf32, #tpu.memory_space<vmem>>, %arg4: memref<1x64xf32, #tpu.memory_space<vmem>>, %arg5: memref<1x64xf32, #tpu.memory_space<vmem>>, %arg6: memref<1x64xf32, #tpu.memory_space<vmem>>, %arg7: memref<64x128xf32, #tpu.memory_space<vmem>>, %arg8: memref<1x128xf32, #tpu.memory_space<vmem>>, %arg9: memref<8x128xf32, #tpu.memory_space<vmem>>, %arg10: memref<8x64xf32, #tpu.memory_space<vmem>>) attributes {dimension_semantics = [#tpu.dimension_semantics<parallel>, #tpu.dimension_semantics<arbitrary>], iteration_bounds = array<i64: 1, 1>, scalar_prefetch = 0 : i64, scratch_operands = 1 : i64, tpu.core_type = #tpu.core_type<tc>, window_params = [{transform_indices = @transform_0, window_bounds = array<i64: 8, 32>}, {pipeline_mode = #tpu.pipeline_mode<synchronous>, transform_indices = @transform_1, window_bounds = array<i64: 32, 64>}, {pipeline_mode = #tpu.pipeline_mode<synchronous>, transform_indices = @transform_2, window_bounds = array<i64: 1, 64>}, {pipeline_mode = #tpu.pipeline_mode<synchronous>, transform_indices = @transform_3, window_bounds = array<i64: 1, 64>}, {pipeline_mode = #tpu.pipeline_mode<synchronous>, transform_indices = @transform_4, window_bounds = array<i64: 1, 64>}, {transform_indices = @transform_5, window_bounds = array<i64: 64, 128>}, {transform_indices = @transform_6, window_bounds = array<i64: 1, 128>}, {transform_indices = @transform_7, window_bounds = array<i64: 8, 128>}]} {
    %c0_i32 = arith.constant 0 : i32
    %0 = arith.cmpi eq, %arg1, %c0_i32 : i32
    %1 = arith.extui %0 : i1 to i32
    %c0_i32_0 = arith.constant 0 : i32
    %2 = arith.cmpi ne, %1, %c0_i32_0 : i32
    scf.if %2 {
      %c0_8 = arith.constant 0 : index
      %c0_9 = arith.constant 0 : index
      %10 = vector.load %arg2[%c0_8, %c0_9] : memref<8x32xf32, #tpu.memory_space<vmem>>, vector<8x32xf32>
      %c0_10 = arith.constant 0 : index
      %c0_11 = arith.constant 0 : index
      %11 = vector.load %arg3[%c0_10, %c0_11] : memref<32x64xf32, #tpu.memory_space<vmem>>, vector<32x64xf32>
      %cst_12 = arith.constant dense<0.000000e+00> : vector<8x64xf32>
      %12 = tpu.matmul %10, %11, %cst_12 {dimension_numbers = #tpu.dot_dimension_numbers<[1], [0], [0], [1], [0, 0, 1, 1], [], []>} : vector<8x32xf32>, vector<32x64xf32>, vector<8x64xf32> -> vector<8x64xf32>
      %c0_13 = arith.constant 0 : index
      %c0_14 = arith.constant 0 : index
      %13 = vector.load %arg4[%c0_13, %c0_14] : memref<1x64xf32, #tpu.memory_space<vmem>>, vector<1x64xf32>
      %14 = vector.broadcast %13 : vector<1x64xf32> to vector<8x64xf32>
      %15 = arith.addf %12, %14 : vector<8x64xf32>
      %cst_15 = arith.constant 0.000000e+00 : f32
      %16 = vector.broadcast %cst_15 : f32 to vector<8x64xf32>
      %17 = arith.maximumf %15, %16 : vector<8x64xf32>
      %cst_16 = arith.constant dense<0.000000e+00> : vector<8xf32>
      %18 = vector.multi_reduction <add>, %17, %cst_16 [1] : vector<8x64xf32> to vector<8xf32>
      %19 = vector.shape_cast %18 : vector<8xf32> to vector<8x1xf32>
      %cst_17 = arith.constant 6.400000e+01 : f32
      %20 = vector.broadcast %cst_17 : f32 to vector<8x1xf32>
      %21 = arith.divf %19, %20 : vector<8x1xf32>
      %22 = vector.broadcast %21 : vector<8x1xf32> to vector<8x64xf32>
      %23 = arith.subf %17, %22 : vector<8x64xf32>
      %24 = arith.mulf %23, %23 : vector<8x64xf32>
      %cst_18 = arith.constant dense<0.000000e+00> : vector<8xf32>
      %25 = vector.multi_reduction <add>, %24, %cst_18 [1] : vector<8x64xf32> to vector<8xf32>
      %26 = vector.shape_cast %25 : vector<8xf32> to vector<8x1xf32>
      %cst_19 = arith.constant 6.400000e+01 : f32
      %27 = vector.broadcast %cst_19 : f32 to vector<8x1xf32>
      %28 = arith.divf %26, %27 : vector<8x1xf32>
      %cst_20 = arith.constant 9.99999974E-6 : f32
      %29 = vector.broadcast %cst_20 : f32 to vector<8x1xf32>
      %30 = arith.addf %28, %29 : vector<8x1xf32>
      %31 = math.rsqrt %30 : vector<8x1xf32>
      %32 = vector.broadcast %31 : vector<8x1xf32> to vector<8x64xf32>
      %33 = arith.mulf %23, %32 : vector<8x64xf32>
      %c0_21 = arith.constant 0 : index
      %c0_22 = arith.constant 0 : index
      %34 = vector.load %arg5[%c0_21, %c0_22] : memref<1x64xf32, #tpu.memory_space<vmem>>, vector<1x64xf32>
      %35 = vector.broadcast %34 : vector<1x64xf32> to vector<8x64xf32>
      %36 = arith.mulf %33, %35 : vector<8x64xf32>
      %c0_23 = arith.constant 0 : index
      %c0_24 = arith.constant 0 : index
      %37 = vector.load %arg6[%c0_23, %c0_24] : memref<1x64xf32, #tpu.memory_space<vmem>>, vector<1x64xf32>
      %38 = vector.broadcast %37 : vector<1x64xf32> to vector<8x64xf32>
      %39 = arith.addf %36, %38 : vector<8x64xf32>
      %c0_25 = arith.constant 0 : index
      %c0_26 = arith.constant 0 : index
      %40 = vector.load %arg10[%c0_25, %c0_26] : memref<8x64xf32, #tpu.memory_space<vmem>>, vector<8x64xf32>
      tpu.vector_store %arg10[%c0_25, %c0_26], %39 {strides = array<i32>} : memref<8x64xf32, #tpu.memory_space<vmem>>, vector<8x64xf32>,
    } else {
    }
    %c0 = arith.constant 0 : index
    %c0_1 = arith.constant 0 : index
    %3 = vector.load %arg10[%c0, %c0_1] : memref<8x64xf32, #tpu.memory_space<vmem>>, vector<8x64xf32>
    %c0_2 = arith.constant 0 : index
    %c0_3 = arith.constant 0 : index
    %4 = vector.load %arg7[%c0_2, %c0_3] : memref<64x128xf32, #tpu.memory_space<vmem>>, vector<64x128xf32>
    %cst = arith.constant dense<0.000000e+00> : vector<8x128xf32>
    %5 = tpu.matmul %3, %4, %cst {dimension_numbers = #tpu.dot_dimension_numbers<[1], [0], [0], [1], [0, 0, 1, 1], [], []>} : vector<8x64xf32>, vector<64x128xf32>, vector<8x128xf32> -> vector<8x128xf32>
    %c0_4 = arith.constant 0 : index
    %c0_5 = arith.constant 0 : index
    %6 = vector.load %arg8[%c0_4, %c0_5] : memref<1x128xf32, #tpu.memory_space<vmem>>, vector<1x128xf32>
    %7 = vector.broadcast %6 : vector<1x128xf32> to vector<8x128xf32>
    %8 = arith.addf %5, %7 : vector<8x128xf32>
    %c0_6 = arith.constant 0 : index
    %c0_7 = arith.constant 0 : index
    %9 = vector.load %arg9[%c0_6, %c0_7] : memref<8x128xf32, #tpu.memory_space<vmem>>, vector<8x128xf32>
    tpu.vector_store %arg9[%c0_6, %c0_7], %8 {strides = array<i32>} : memref<8x128xf32, #tpu.memory_space<vmem>>, vector<8x128xf32>,
    return
  }
  func.func @transform_0(%arg0: i32, %arg1: i32) -> (i32, i32) {
    %c0_i32 = arith.constant 0 : i32
    %c0_i32_0 = arith.constant 0 : i32
    return %arg0, %c0_i32 : i32, i32
  }
  func.func @transform_1(%arg0: i32, %arg1: i32) -> (i32, i32) {
    %c0_i32 = arith.constant 0 : i32
    %c0_i32_0 = arith.constant 0 : i32
    %c0_i32_1 = arith.constant 0 : i32
    return %c0_i32, %c0_i32_0 : i32, i32
  }
  func.func @transform_2(%arg0: i32, %arg1: i32) -> (i32, i32) {
    %c0_i32 = arith.constant 0 : i32
    %c0_i32_0 = arith.constant 0 : i32
    %c0_i32_1 = arith.constant 0 : i32
    return %c0_i32, %c0_i32_0 : i32, i32
  }
  func.func @transform_3(%arg0: i32, %arg1: i32) -> (i32, i32) {
    %c0_i32 = arith.constant 0 : i32
    %c0_i32_0 = arith.constant 0 : i32
    %c0_i32_1 = arith.constant 0 : i32
    return %c0_i32, %c0_i32_0 : i32, i32
  }
  func.func @transform_4(%arg0: i32, %arg1: i32) -> (i32, i32) {
    %c0_i32 = arith.constant 0 : i32
    %c0_i32_0 = arith.constant 0 : i32
    %c0_i32_1 = arith.constant 0 : i32
    return %c0_i32, %c0_i32_0 : i32, i32
  }
  func.func @transform_5(%arg0: i32, %arg1: i32) -> (i32, i32) {
    %c0_i32 = arith.constant 0 : i32
    %c0_i32_0 = arith.constant 0 : i32
    return %c0_i32, %arg1 : i32, i32
  }
  func.func @transform_6(%arg0: i32, %arg1: i32) -> (i32, i32) {
    %c0_i32 = arith.constant 0 : i32
    %c0_i32_0 = arith.constant 0 : i32
    return %c0_i32, %arg1 : i32, i32
  }
  func.func @transform_7(%arg0: i32, %arg1: i32) -> (i32, i32) {
    %c0_i32 = arith.constant 0 : i32
    return %arg0, %arg1 : i32, i32
  }
}

</mosaic_0001>

<llo_original>
// kernel: tpu_custom_call.1
$region0: #{tpu_custom_call.1}
  #allocation0 [shape = 'u32[]', space=smem, size = 0x4, offset = 0x4, fixed_abs, tag = 'smem constant byte address 0x4 - core index']
  #allocation1 [shape = 'u32[144,128]{1,0:T(1,128)}', space=vmem, size = 0x12000, scoped, tag = 'internal scratch']
  #allocation2 [shape = 'f32[8,64]{1,0:T(8,128)}', space=vmem, size = 0x1000, scoped, tag = 'scratch operand']
  %s0 = inlined_call_operand.hbm [shape: f32[8,32], index: 0, kind: input, shape index: {}]
  %s1 = inlined_call_operand.hbm [shape: f32[32,64], index: 1, kind: input, shape index: {}]
  %s2 = inlined_call_operand.vmem [shape: f32[1,64], index: 2, kind: input, shape index: {}]
  %s3 = inlined_call_operand.vmem [shape: f32[1,64], index: 3, kind: input, shape index: {}]
  %s4 = inlined_call_operand.vmem [shape: f32[1,64], index: 4, kind: input, shape index: {}]
  %s5 = inlined_call_operand.hbm [shape: f32[64,128], index: 5, kind: input, shape index: {}]
  %s6 = inlined_call_operand.vmem [shape: f32[1,128], index: 6, kind: input, shape index: {}]
  %s7 = inlined_call_operand.hbm [shape: f32[8,128], index: 7, kind: output, shape index: {}]
  %s8 = sld [smem:[#allocation0]]
  $region54: #{tpu_custom_call.1} parent=0
    _
  %s10 = ssub.s32 1, %s8
  %s11 = scalar_select 0, %s10, %s8
  $region1: #{tpu_custom_call.1} parent=0
    #allocation3 [shape = 'u8[4096]{0}', space=vmem, size = 0x1000, scoped, tag = 'input window, operand 0, single buffered']
    #allocation4 [shape = 's32[1]{0}', space=sflag, size = 0x4, scoped, tag = 'scoped memory for tpu_custom_call.1']
    #allocation5 [shape = 's32[1]{0}', space=sflag, size = 0x4, scoped, tag = 'scoped memory for tpu_custom_call.1']
    #allocation6 [shape = 'u8[16384]{0}', space=vmem, size = 0x4000, scoped, tag = 'input window, operand 1, single buffered']
    #allocation7 [shape = 's32[1]{0}', space=sflag, size = 0x4, scoped, tag = 'scoped memory for tpu_custom_call.1']
    #allocation8 [shape = 'u8[32768]{0}', space=vmem, size = 0x8000, scoped, tag = 'input window, operand 5, single buffered']
    #allocation9 [shape = 'u8[4096]{0}', space=vmem, size = 0x1000, scoped, tag = 'output window, operand 0, single buffered']
    %12 = vsyncpa [#allocation4], 0
    %13 = vsyncpa [#allocation7], 0
    %14 = vsyncpa [#allocation5], 0
    // Predicated region
    $region2: #{tpu_custom_call.1} parent=1 // pred_check
      _
    $region3: #{tpu_custom_call.1} parent=1 // pred_check_branch
      %16 = sbr.rel (0) target = $region5
    $region4: #{tpu_custom_call.1} parent=1 // pred_region
      %s18 = ssub.s32 128, 128
      %19 = vsyncadd [#allocation4], %s18
      %s21 = sshll.u32 [#allocation3], 4
      %s22 = int_to_ptr.vmem [resolvable:$true] %s21
      %24 = dma.hbm_to_vmem [thread:$0]  %s0, 128, %s22, [#allocation4]
    $region5: #{tpu_custom_call.1} parent=1 // pred_fallthru
      _
    // Predicated region
    $region6: #{tpu_custom_call.1} parent=1 // pred_check
      _
    $region7: #{tpu_custom_call.1} parent=1 // pred_check_branch
      %26 = sbr.rel (0) target = $region9
    $region8: #{tpu_custom_call.1} parent=1 // pred_region
      %s28 = ssub.s32 512, 512
      %29 = vsyncadd [#allocation7], %s28
      %s30 = sshll.u32 [#allocation6], 4
      %s31 = int_to_ptr.vmem [resolvable:$true] %s30
      %36 = dma.hbm_to_vmem [thread:$0]  %s1, 512, %s31, [#allocation7], 128, 128, 8
    $region9: #{tpu_custom_call.1} parent=1 // pred_fallthru
      _
    // Predicated region
    $region10: #{tpu_custom_call.1} parent=1 // pred_check
      _
    $region11: #{tpu_custom_call.1} parent=1 // pred_check_branch
      %38 = sbr.rel (0) target = $region13
    $region12: #{tpu_custom_call.1} parent=1 // pred_region
      _
    $region13: #{tpu_custom_call.1} parent=1 // pred_fallthru
      _
    // Predicated region
    $region14: #{tpu_custom_call.1} parent=1 // pred_check
      _
    $region15: #{tpu_custom_call.1} parent=1 // pred_check_branch
      %40 = sbr.rel (0) target = $region17
    $region16: #{tpu_custom_call.1} parent=1 // pred_region
      _
    $region17: #{tpu_custom_call.1} parent=1 // pred_fallthru
      _
    // Predicated region
    $region18: #{tpu_custom_call.1} parent=1 // pred_check
      _
    $region19: #{tpu_custom_call.1} parent=1 // pred_check_branch
      %42 = sbr.rel (0) target = $region21
    $region20: #{tpu_custom_call.1} parent=1 // pred_region
      _
    $region21: #{tpu_custom_call.1} parent=1 // pred_fallthru
      _
    // Predicated region
    $region22: #{tpu_custom_call.1} parent=1 // pred_check
      _
    $region23: #{tpu_custom_call.1} parent=1 // pred_check_branch
      %44 = sbr.rel (0) target = $region25
    $region24: #{tpu_custom_call.1} parent=1 // pred_region
      %s46 = ssub.s32 1024, 1024
      %47 = vsyncadd [#allocation7], %s46
      %s48 = sshll.u32 [#allocation8], 4
      %s49 = int_to_ptr.vmem [resolvable:$true] %s48
      %54 = dma.hbm_to_vmem [thread:$0]  %s5, 1024, %s49, [#allocation7], 128, 128, 8
    $region25: #{tpu_custom_call.1} parent=1 // pred_fallthru
      _
    // Predicated region
    $region26: #{tpu_custom_call.1} parent=1 // pred_check
      _
    $region27: #{tpu_custom_call.1} parent=1 // pred_check_branch
      %56 = sbr.rel (0) target = $region29
    $region28: #{tpu_custom_call.1} parent=1 // pred_region
      _
    $region29: #{tpu_custom_call.1} parent=1 // pred_fallthru
      _
    // Predicated region
    $region30: #{tpu_custom_call.1} parent=1 // pred_check
      _
    $region31: #{tpu_custom_call.1} parent=1 // pred_check_branch
      %58 = sbr.rel (0) target = $region33
    $region32: #{tpu_custom_call.1} parent=1 // pred_region
      %59 = dma.done [#allocation4], 128
    $region33: #{tpu_custom_call.1} parent=1 // pred_fallthru
      _
    // Predicated region
    $region34: #{tpu_custom_call.1} parent=1 // pred_check
      _
    $region35: #{tpu_custom_call.1} parent=1 // pred_check_branch
      %61 = sbr.rel (0) target = $region37
    $region36: #{tpu_custom_call.1} parent=1 // pred_region
      %62 = dma.done [#allocation7], 512
    $region37: #{tpu_custom_call.1} parent=1 // pred_fallthru
      _
    // Predicated region
    $region38: #{tpu_custom_call.1} parent=1 // pred_check
      _
    $region39: #{tpu_custom_call.1} parent=1 // pred_check_branch
      %64 = sbr.rel (0) target = $region41
    $region40: #{tpu_custom_call.1} parent=1 // pred_region
      %65 = dma.done [#allocation7], 1024
    $region41: #{tpu_custom_call.1} parent=1 // pred_fallthru
      _
    %p66 = scmp.eq.s32.totalorder 0, 0
    // Predicated region
    $region42: #{tpu_custom_call.1} parent=1 // pred_check
      %p67 = pneg %p66
    $region43: #{tpu_custom_call.1} parent=1 // pred_check_branch
      %69 = sbr.rel (%p67) target = $region45
    $region44: #{tpu_custom_call.1} parent=1 // pred_region
      %v70 = vld [vmem:[#allocation3] sm:$0xff]
      %v71 = vld [vmem:[#allocation6] sm:$0xff]
      %v72 = vld [vmem:[#allocation6 + $0x8] sm:$0xff]
      %v73 = vld [vmem:[#allocation6 + $0x10] sm:$0xff]
      %v74 = vld [vmem:[#allocation6 + $0x18] sm:$0xff]
      %v75 = vld [vmem:[%s2] sm:$0x1]
      %v77 = vlaneseq
      %v78 = vshrl.u32 %v77, 7
      %v79 = vsub.s32 0, %v78
      %v80 = vrot.slane %v75, %v79
      %vm82 = vcmask 261120
      %v84 = vsel %vm82, %v70, 0
      %86 = vmatprep.subr.mxu0 0.0
      %87 = vmatpush1.msra.mxu0 %v71
      %88 = vmatprep.subr.mxu0 0.0
      %89 = vmatpush1.msra.mxu0 %v72
      %90 = vmatprep.subr.mxu0 0.0
      %91 = vmatpush1.msra.mxu0 %v73
      %92 = vmatprep.subr.mxu0 0.0
      %93 = vmatpush1.msra.mxu0 %v74
      %94 = vmatprep.subr.mxu0 0.0
      %95 = vmatpush1.msra.mxu0 0.0
      %96 = vmatprep.subr.mxu0 0.0
      %97 = vmatpush1.msra.mxu0 0.0
      %98 = vmatprep.subr.mxu0 0.0
      %99 = vmatpush1.msra.mxu0 0.0
      %100 = vmatprep.subr.mxu0 0.0
      %101 = vmatpush1.msra.mxu0 0.0
      %102 = vmatprep.subr.mxu0 0.0
      %103 = vmatpush1.msra.mxu0 0.0
      %104 = vmatprep.subr.mxu0 0.0
      %105 = vmatpush1.msra.mxu0 0.0
      %106 = vmatprep.subr.mxu0 0.0
      %107 = vmatpush1.msra.mxu0 0.0
      %108 = vmatprep.subr.mxu0 0.0
      %109 = vmatpush1.msra.mxu0 0.0
      %110 = vmatprep.subr.mxu0 0.0
      %111 = vmatpush1.msra.mxu0 0.0
      %112 = vmatprep.subr.mxu0 0.0
      %113 = vmatpush1.msra.mxu0 0.0
      %114 = vmatprep.subr.mxu0 0.0
      %115 = vmatpush1.msra.mxu0 0.0
      %116 = vmatprep.subr.mxu0 0.0
      %117 = vmatpush1.msra.mxu0 0.0
      %118 = vmatprep.subr.mxu0 0.0
      %119 = vmatpush1.msra.mxu0 0.0
      %120 = vmatprep.subr.mxu0 0.0
      %121 = vmatpush1.msra.mxu0 0.0
      %122 = vmatprep.subr.mxu0 0.0
      %123 = vmatpush1.msra.mxu0 0.0
      %124 = vmatprep.subr.mxu0 0.0
      %125 = vmatpush1.msra.mxu0 0.0
      %126 = vmatprep.subr.mxu0 0.0
      %127 = vmatpush1.msra.mxu0 0.0
      %128 = vmatprep.subr.mxu0 0.0
      %129 = vmatpush1.msra.mxu0 0.0
      %130 = vmatprep.subr.mxu0 0.0
      %131 = vmatpush1.msra.mxu0 0.0
      %132 = vmatprep.subr.mxu0 0.0
      %133 = vmatpush1.msra.mxu0 0.0
      %134 = vmatprep.subr.mxu0 0.0
      %135 = vmatpush1.msra.mxu0 0.0
      %136 = vmatprep.subr.mxu0 0.0
      %137 = vmatpush1.msra.mxu0 0.0
      %138 = vmatprep.subr.mxu0 0.0
      %139 = vmatpush1.msra.mxu0 0.0
      %140 = vmatprep.subr.mxu0 0.0
      %141 = vmatpush1.msra.mxu0 0.0
      %142 = vmatprep.subr.mxu0 0.0
      %143 = vmatpush1.msra.mxu0 0.0
      %144 = vmatprep.subr.mxu0 0.0
      %145 = vmatpush1.msra.mxu0 0.0
      %146 = vmatprep.subr.mxu0 0.0
      %147 = vmatpush1.msra.mxu0 0.0
      %148 = vmatprep.subr.mxu0 0.0
      %149 = vmatpush1.msra.mxu0 0.0
      %150 = vmatprep.mubr.f32.mxu0 0.0
      %151 = vmatmul.mubr.f32.gmra.mrb[0].mxu0 %v84
      %v152 = vpop.f32.mrb[0].mxu0
      %v153 = vadd.f32 %v80, %v152
      %v154 = vpop.f32.mrb[0].mxu0
      %155 = vdwg.mxu0
      %v156 = vmax.f32 %v153, 0.0
      %vm157 = vcmask 523264
      %v158 = vsel %vm157, %v156, 0.0
      %159 = vadd.xlane.f32.xlu0 %v158
      %v160 = vpop.xlane.xlu0 %159
      %v161 = vrcp.pop 64.0
      %v162 = vmul.f32 %v160, %v161
      %v163 = vsub.f32 %v156, %v162
      %v164 = vmul.f32 %v163, %v163
      %v165 = vsel %vm157, %v164, 0.0
      %166 = vadd.xlane.f32.xlu0 %v165
      %v167 = vpop.xlane.xlu0 %166
      %v168 = vmul.f32 %v167, %v161
      %v169 = vadd.f32 %v168, 1e-05
      %v170 = vrsqrt.pop %v169
      %v171 = vmul.f32 %v163, %v170
      %v172 = vld [vmem:[%s3] sm:$0x1]
      %v174 = vlaneseq
      %v175 = vshrl.u32 %v174, 7
      %v176 = vsub.s32 0, %v175
      %v177 = vrot.slane %v172, %v176
      %v179 = vmul.f32 %v171, %v177
      %v180 = vld [vmem:[%s4] sm:$0x1]
      %v182 = vlaneseq
      %v183 = vshrl.u32 %v182, 7
      %v184 = vsub.s32 0, %v183
      %v185 = vrot.slane %v180, %v184
      %v187 = vadd.f32 %v179, %v185
      %188 = vst.msk [vmem:[#allocation2] sm:$0xff] %vm157, %v187
    $region45: #{tpu_custom_call.1} parent=1 // pred_fallthru
      _
    %v189 = vld [vmem:[#allocation2] sm:$0xff]
    %v190 = vld [vmem:[#allocation8] sm:$0xff]
    %v191 = vld [vmem:[#allocation8 + $0x8] sm:$0xff]
    %v192 = vld [vmem:[#allocation8 + $0x10] sm:$0xff]
    %v193 = vld [vmem:[#allocation8 + $0x18] sm:$0xff]
    %v194 = vld [vmem:[#allocation8 + $0x20] sm:$0xff]
    %v195 = vld [vmem:[#allocation8 + $0x28] sm:$0xff]
    %v196 = vld [vmem:[#allocation8 + $0x30] sm:$0xff]
    %v197 = vld [vmem:[#allocation8 + $0x38] sm:$0xff]
    %v198 = vld [vmem:[%s6] sm:$0x1]
    %v200 = vlaneseq
    %v201 = vshrl.u32 %v200, 7
    %v202 = vsub.s32 0, %v201
    %v203 = vrot.slane %v198, %v202
    %vm205 = vcmask 523264
    %v207 = vsel %vm205, %v189, 0
    %209 = vmatprep.subr.mxu0 0.0
    %210 = vmatpush1.msra.mxu0 %v190
    %211 = vmatprep.subr.mxu0 0.0
    %212 = vmatpush1.msra.mxu0 %v191
    %213 = vmatprep.subr.mxu0 0.0
    %214 = vmatpush1.msra.mxu0 %v192
    %215 = vmatprep.subr.mxu0 0.0
    %216 = vmatpush1.msra.mxu0 %v193
    %217 = vmatprep.subr.mxu0 0.0
    %218 = vmatpush1.msra.mxu0 %v194
    %219 = vmatprep.subr.mxu0 0.0
    %220 = vmatpush1.msra.mxu0 %v195
    %221 = vmatprep.subr.mxu0 0.0
    %222 = vmatpush1.msra.mxu0 %v196
    %223 = vmatprep.subr.mxu0 0.0
    %224 = vmatpush1.msra.mxu0 %v197
    %225 = vmatprep.subr.mxu0 0.0
    %226 = vmatpush1.msra.mxu0 0.0
    %227 = vmatprep.subr.mxu0 0.0
    %228 = vmatpush1.msra.mxu0 0.0
    %229 = vmatprep.subr.mxu0 0.0
    %230 = vmatpush1.msra.mxu0 0.0
    %231 = vmatprep.subr.mxu0 0.0
    %232 = vmatpush1.msra.mxu0 0.0
    %233 = vmatprep.subr.mxu0 0.0
    %234 = vmatpush1.msra.mxu0 0.0
    %235 = vmatprep.subr.mxu0 0.0
    %236 = vmatpush1.msra.mxu0 0.0
    %237 = vmatprep.subr.mxu0 0.0
    %238 = vmatpush1.msra.mxu0 0.0
    %239 = vmatprep.subr.mxu0 0.0
    %240 = vmatpush1.msra.mxu0 0.0
    %241 = vmatprep.subr.mxu0 0.0
    %242 = vmatpush1.msra.mxu0 0.0
    %243 = vmatprep.subr.mxu0 0.0
    %244 = vmatpush1.msra.mxu0 0.0
    %245 = vmatprep.subr.mxu0 0.0
    %246 = vmatpush1.msra.mxu0 0.0
    %247 = vmatprep.subr.mxu0 0.0
    %248 = vmatpush1.msra.mxu0 0.0
    %249 = vmatprep.subr.mxu0 0.0
    %250 = vmatpush1.msra.mxu0 0.0
    %251 = vmatprep.subr.mxu0 0.0
    %252 = vmatpush1.msra.mxu0 0.0
    %253 = vmatprep.subr.mxu0 0.0
    %254 = vmatpush1.msra.mxu0 0.0
    %255 = vmatprep.subr.mxu0 0.0
    %256 = vmatpush1.msra.mxu0 0.0
    %257 = vmatprep.subr.mxu0 0.0
    %258 = vmatpush1.msra.mxu0 0.0
    %259 = vmatprep.subr.mxu0 0.0
    %260 = vmatpush1.msra.mxu0 0.0
    %261 = vmatprep.subr.mxu0 0.0
    %262 = vmatpush1.msra.mxu0 0.0
    %263 = vmatprep.subr.mxu0 0.0
    %264 = vmatpush1.msra.mxu0 0.0
    %265 = vmatprep.subr.mxu0 0.0
    %266 = vmatpush1.msra.mxu0 0.0
    %267 = vmatprep.subr.mxu0 0.0
    %268 = vmatpush1.msra.mxu0 0.0
    %269 = vmatprep.subr.mxu0 0.0
    %270 = vmatpush1.msra.mxu0 0.0
    %271 = vmatprep.subr.mxu0 0.0
    %272 = vmatpush1.msra.mxu0 0.0
    %273 = vmatprep.mubr.f32.mxu0 0.0
    %274 = vmatmul.mubr.f32.gmra.mrb[0].mxu0 %v207
    %v275 = vpop.f32.mrb[0].mxu0
    %v276 = vadd.f32 %v203, %v275
    %v277 = vpop.f32.mrb[0].mxu0
    %278 = vdwg.mxu0
    %279 = vst [vmem:[#allocation9] sm:$0xff] %v276
    // Predicated region
    $region46: #{tpu_custom_call.1} parent=1 // pred_check
      _
    $region47: #{tpu_custom_call.1} parent=1 // pred_check_branch
      %281 = sbr.rel (0) target = $region49
    $region48: #{tpu_custom_call.1} parent=1 // pred_region
      %s283 = ssub.s32 128, 128
      %284 = vsyncadd [#allocation5], %s283
      %s286 = sshll.u32 [#allocation9], 4
      %s287 = int_to_ptr.vmem [resolvable:$true] %s286
      %289 = dma.vmem_to_hbm [thread:$0]  %s287, 128, %s7, [#allocation5]
    $region49: #{tpu_custom_call.1} parent=1 // pred_fallthru
      _
    // Predicated region
    $region50: #{tpu_custom_call.1} parent=1 // pred_check
      _
    $region51: #{tpu_custom_call.1} parent=1 // pred_check_branch
      %291 = sbr.rel (0) target = $region53
    $region52: #{tpu_custom_call.1} parent=1 // pred_region
      %292 = dma.done [#allocation5], 128
    $region53: #{tpu_custom_call.1} parent=1 // pred_fallthru
      _
    %293 = vsyncpa [#allocation4], 1
    %294 = vsyncpa [#allocation7], 1
    %295 = vsyncpa [#allocation5], 1

</llo_original>
